<compile_context>
chip_gen: v7x
topology: tpu7x:2x2x1
jax: 0.10.0
libtpu: 0.0.40
codegen_flags: <defaults>
</compile_context>

<pallas_src>
import functools

import jax
import jax.numpy as jnp
from jax.experimental import pallas as pl
from jax.experimental.pallas import tpu as pltpu

H_PAD = 128        # lane-dense padding for feature / hidden dim
C_PAD = 128        # lane-dense padding for the class dim
TM = 16            # node-row block (bf16 sublane-tile aligned)
NUM_LAYERS = 3


def gcn_kernel(x_ref, a_ref, w_ref, b_ref, wlin_ref, blin_ref, out_ref,
               h_state, acc, *, tm, n_real, n_pad):
    """One grid step = one GCN layer (axis 0) x one node-row block (axis 1).

    h_state : VMEM (2, n_blocks, tm, H_PAD) bf16 ping-pong buffer holding the
              full previous / current layer activations.
    acc     : VMEM (1, C_PAD) f32 accumulator for the pooled + projected logits.
    """
    n_blocks = n_pad // tm
    l = pl.program_id(0)                 # layer index (sequential)
    i = pl.program_id(1)                 # node-row block index (sequential)

    @pl.when(jnp.logical_and(l == 0, i == 0))
    def _init():
        # seed the ping-pong buffer with the (padded, bf16) input features
        h_state[0] = x_ref[...].reshape(n_blocks, tm, H_PAD)
        acc[...] = jnp.zeros_like(acc)

    src = jax.lax.rem(l, 2)              # slab holding layer-l input
    dst = 1 - src                        # slab receiving layer-l output

    # full previous-layer activations, resident in VMEM (bf16)
    h_prev = h_state[src].reshape(n_pad, H_PAD)

    # GCN: out = (D^-1/2 (A+I) D^-1/2) @ h @ W + b
    # both matmuls on the MXU: bf16 operands, f32 accumulation
    agg = jnp.dot(a_ref[...], h_prev, preferred_element_type=jnp.float32)
    out = jnp.dot(agg.astype(jnp.bfloat16), w_ref[...],
                  preferred_element_type=jnp.float32) + b_ref[...]

    # F.normalize(out, p=2, dim=1), eps=1e-12, via EUP rsqrt; then ReLU (f32)
    sumsq = jnp.sum(out * out, axis=1, keepdims=True)
    out = out * jax.lax.rsqrt(jnp.maximum(sumsq, 1e-24))
    out = jnp.maximum(out, 0.0)

    # zero padded node rows so they never reach the pooled mean
    if n_real < n_pad:
        rows = i * tm + jax.lax.broadcasted_iota(jnp.int32, (tm, 1), 0)
        out = jnp.where(rows < n_real, out, 0.0)

    # stash this block for the next layer (ping-pong slab)
    h_state[dst, i] = out.astype(jnp.bfloat16)

    # global_mean_pool + concat + final Linear folded together:
    # 1/N is pre-folded into wlin; the concat becomes a per-layer slab of wlin.
    p = jnp.sum(out, axis=0, keepdims=True)                       # (1, H_PAD)
    acc[...] += jnp.dot(p, wlin_ref[...], preferred_element_type=jnp.float32)

    @pl.when(jnp.logical_and(l == NUM_LAYERS - 1, i == n_blocks - 1))
    def _finalize():
        out_ref[...] = acc[...] + blin_ref[...]


def init_params(key, num_features, hidden_size, num_classes):
    """Deterministic parameter init (shapes follow the PyTorch module)."""
    ks = jax.random.split(key, 8)

    def lin_w(k, fan_in, fan_out):
        bound = 1.0 / float(fan_in) ** 0.5
        # stored transposed: (in, out) so that x @ W computes x @ W_torch^T
        return jax.random.uniform(k, (fan_in, fan_out), jnp.float32, -bound, bound)

    def lin_b(k, fan_in, fan_out):
        bound = 1.0 / float(fan_in) ** 0.5
        return jax.random.uniform(k, (1, fan_out), jnp.float32, -bound, bound)

    H, F, C = hidden_size, num_features, num_classes
    return dict(
        w1=lin_w(ks[0], F, H), b1=lin_b(ks[1], F, H),
        w2=lin_w(ks[2], H, H), b2=lin_b(ks[3], H, H),
        w3=lin_w(ks[4], H, H), b3=lin_b(ks[5], H, H),
        wlin=lin_w(ks[6], 3 * H, C), blin=lin_b(ks[7], 3 * H, C),
    )


def graph_gcn_forward(x, edge_index, params, num_classes, tm=TM):
    """x: (N, num_features) f32, edge_index: (2, E) int32 (src, dst)."""
    n, f = x.shape
    hidden = params["w1"].shape[1]
    n_blocks = pl.cdiv(n, tm)
    n_pad = n_blocks * tm

    # ---- GCN normalization: D^-1/2 (A + I) D^-1/2 (dense, matches PyG gcn_norm) ----
    # TODO(synk): for large sparse graphs replace the dense O(N^2) adjacency with
    # CSR row-offsets/col-indices via PrefetchScalarGridSpec + manual DMA gather.
    src, dst = edge_index[0], edge_index[1]
    not_self = (src != dst).astype(jnp.float32)   # add_remaining_self_loops semantics
    a = jnp.zeros((n, n), jnp.float32).at[dst, src].add(not_self) \
        + jnp.eye(n, dtype=jnp.float32)
    d_inv_sqrt = jax.lax.rsqrt(jnp.sum(a, axis=1))
    a = a * d_inv_sqrt[:, None] * d_inv_sqrt[None, :]
    a_p = jnp.zeros((n_pad, n_pad), jnp.bfloat16).at[:n, :n].set(a.astype(jnp.bfloat16))

    x_p = jnp.zeros((n_pad, H_PAD), jnp.bfloat16).at[:n, :f].set(x.astype(jnp.bfloat16))

    def pad_w(w):
        fi, fo = w.shape
        return jnp.zeros((H_PAD, H_PAD), jnp.bfloat16).at[:fi, :fo].set(
            w.astype(jnp.bfloat16))

    def pad_b(b):
        return jnp.zeros((1, H_PAD), jnp.float32).at[:, :b.shape[1]].set(b)

    w_stack = jnp.stack([pad_w(params["w1"]), pad_w(params["w2"]), pad_w(params["w3"])])
    b_stack = jnp.stack([pad_b(params["b1"]), pad_b(params["b2"]), pad_b(params["b3"])])

    # final Linear over the channel-concat -> three (hidden, C) slabs; fold the
    # 1/N of global_mean_pool into the weights so the kernel only accumulates sums.
    wlin = params["wlin"] * (1.0 / n)
    wlin_stack = jnp.stack([
        jnp.zeros((H_PAD, C_PAD), jnp.float32)
           .at[:hidden, :num_classes].set(wlin[l * hidden:(l + 1) * hidden])
        for l in range(NUM_LAYERS)
    ])
    blin = jnp.zeros((1, C_PAD), jnp.float32).at[:, :num_classes].set(params["blin"])

    kernel = functools.partial(gcn_kernel, tm=tm, n_real=n, n_pad=n_pad)

    out = pl.pallas_call(
        kernel,
        out_shape=jax.ShapeDtypeStruct((1, C_PAD), jnp.float32),
        grid_spec=pltpu.PrefetchScalarGridSpec(
            num_scalar_prefetch=0,
            grid=(NUM_LAYERS, n_blocks),
            in_specs=[
                pl.BlockSpec((n_pad, H_PAD), lambda l, i: (0, 0)),            # x (resident)
                pl.BlockSpec((tm, n_pad), lambda l, i: (i, 0)),               # A row block (streamed)
                pl.BlockSpec((None, H_PAD, H_PAD), lambda l, i: (l, 0, 0)),   # W_l
                pl.BlockSpec((None, 1, H_PAD), lambda l, i: (l, 0, 0)),       # b_l
                pl.BlockSpec((None, H_PAD, C_PAD), lambda l, i: (l, 0, 0)),   # final-linear slab_l
                pl.BlockSpec((1, C_PAD), lambda l, i: (0, 0)),                # final-linear bias
            ],
            out_specs=pl.BlockSpec((1, C_PAD), lambda l, i: (0, 0)),
            scratch_shapes=[
                pltpu.VMEM((2, n_pad // tm, tm, H_PAD), jnp.bfloat16),  # ping-pong activations
                pltpu.VMEM((1, C_PAD), jnp.float32),                    # pooled-logit accumulator
            ],
        ),
        compiler_params=pltpu.CompilerParams(
            # both grid axes carry sequential dependencies (layer chaining through
            # the ping-pong scratch, pooled accumulator), so neither is 'parallel'
            dimension_semantics=("arbitrary", "arbitrary")),
    )(x_p, a_p, w_stack, b_stack, wlin_stack, blin)
    return out[:, :num_classes]


if __name__ == "__main__":
    N = 50            # number of nodes (not a multiple of TM -> exercises row masking)
    NUM_FEATURES = 4
    HIDDEN = 32
    NUM_CLASSES = 3
    E = 160           # number of directed edges

    key = jax.random.PRNGKey(0)
    k_x, k_src, k_dst, k_par = jax.random.split(key, 4)

    x = jax.random.normal(k_x, (N, NUM_FEATURES), jnp.float32)
    src = jax.random.randint(k_src, (E,), 0, N, jnp.int32)
    dst = jax.random.randint(k_dst, (E,), 0, N, jnp.int32)
    edge_index = jnp.stack([src, dst], axis=0)   # (2, E)

    params = init_params(k_par, NUM_FEATURES, HIDDEN, NUM_CLASSES)

    out = graph_gcn_forward(x, edge_index, params, NUM_CLASSES)
    out = jax.block_until_ready(out)
    assert out.shape == (1, NUM_CLASSES)
    print("KERNEL_OK")
</pallas_src>

<mosaic_0001>
module attributes {stable_mosaic.version = 11 : i64} {
  func.func @gcn_kernel(%arg0: i32, %arg1: i32, %arg2: memref<64x128xbf16, #tpu.memory_space<vmem>>, %arg3: memref<16x64xbf16, #tpu.memory_space<vmem>>, %arg4: memref<1x128x128xbf16, #tpu.memory_space<vmem>>, %arg5: memref<1x1x128xf32, #tpu.memory_space<vmem>>, %arg6: memref<1x128x128xf32, #tpu.memory_space<vmem>>, %arg7: memref<1x128xf32, #tpu.memory_space<vmem>>, %arg8: memref<1x128xf32, #tpu.memory_space<vmem>>, %arg9: memref<2x4x16x128xbf16, #tpu.memory_space<vmem>>, %arg10: memref<1x128xf32, #tpu.memory_space<vmem>>) attributes {dimension_semantics = [#tpu.dimension_semantics<arbitrary>, #tpu.dimension_semantics<arbitrary>], iteration_bounds = array<i64: 3, 4>, scalar_prefetch = 0 : i64, scratch_operands = 2 : i64, tpu.core_type = #tpu.core_type<tc>, window_params = [{pipeline_mode = #tpu.pipeline_mode<synchronous>, transform_indices = @transform_0, window_bounds = array<i64: 64, 128>}, {transform_indices = @transform_1, window_bounds = array<i64: 16, 64>}, {transform_indices = @transform_2, window_bounds = array<i64: 1, 128, 128>}, {transform_indices = @transform_3, window_bounds = array<i64: 1, 1, 128>}, {transform_indices = @transform_4, window_bounds = array<i64: 1, 128, 128>}, {pipeline_mode = #tpu.pipeline_mode<synchronous>, transform_indices = @transform_5, window_bounds = array<i64: 1, 128>}, {pipeline_mode = #tpu.pipeline_mode<synchronous>, transform_indices = @transform_6, window_bounds = array<i64: 1, 128>}]} {
    %c0_i32 = arith.constant 0 : i32
    %0 = arith.cmpi eq, %arg0, %c0_i32 : i32
    %c0_i32_0 = arith.constant 0 : i32
    %1 = arith.cmpi eq, %arg1, %c0_i32_0 : i32
    %2 = arith.andi %0, %1 : i1
    %3 = arith.extui %2 : i1 to i32
    %c0_i32_1 = arith.constant 0 : i32
    %4 = arith.cmpi ne, %3, %c0_i32_1 : i32
    scf.if %4 {
      %c0_30 = arith.constant 0 : index
      %c0_31 = arith.constant 0 : index
      %60 = vector.load %arg2[%c0_30, %c0_31] : memref<64x128xbf16, #tpu.memory_space<vmem>>, vector<64x128xbf16>
      %61 = vector.shape_cast %60 : vector<64x128xbf16> to vector<4x16x128xbf16>
      %c0_32 = arith.constant 0 : index
      %c0_33 = arith.constant 0 : index
      %c0_34 = arith.constant 0 : index
      %c0_35 = arith.constant 0 : index
      %62 = vector.load %arg9[%c0_32, %c0_33, %c0_34, %c0_35] : memref<2x4x16x128xbf16, #tpu.memory_space<vmem>>, vector<1x4x16x128xbf16>
      %63 = vector.shape_cast %62 : vector<1x4x16x128xbf16> to vector<4x16x128xbf16>
      %64 = vector.shape_cast %61 : vector<4x16x128xbf16> to vector<1x4x16x128xbf16>
      tpu.vector_store %arg9[%c0_32, %c0_33, %c0_34, %c0_35], %64 {strides = array<i32>} : memref<2x4x16x128xbf16, #tpu.memory_space<vmem>>, vector<1x4x16x128xbf16>,
      %cst_36 = arith.constant 0.000000e+00 : f32
      %65 = vector.broadcast %cst_36 : f32 to vector<1x128xf32>
      %c0_37 = arith.constant 0 : index
      %c0_38 = arith.constant 0 : index
      %66 = vector.load %arg10[%c0_37, %c0_38] : memref<1x128xf32, #tpu.memory_space<vmem>>, vector<1x128xf32>
      tpu.vector_store %arg10[%c0_37, %c0_38], %65 {strides = array<i32>} : memref<1x128xf32, #tpu.memory_space<vmem>>, vector<1x128xf32>,
    } else {
    }
    %c2_i32 = arith.constant 2 : i32
    %5 = arith.remsi %arg0, %c2_i32 : i32
    %c1_i32 = arith.constant 1 : i32
    %6 = arith.subi %c1_i32, %5 : i32
    %7 = arith.index_cast %5 : i32 to index
    %c0 = arith.constant 0 : index
    %c0_2 = arith.constant 0 : index
    %c0_3 = arith.constant 0 : index
    %8 = vector.load %arg9[%7, %c0, %c0_2, %c0_3] : memref<2x4x16x128xbf16, #tpu.memory_space<vmem>>, vector<1x4x16x128xbf16>
    %9 = vector.shape_cast %8 : vector<1x4x16x128xbf16> to vector<4x16x128xbf16>
    %10 = vector.shape_cast %9 : vector<4x16x128xbf16> to vector<64x128xbf16>
    %c0_4 = arith.constant 0 : index
    %c0_5 = arith.constant 0 : index
    %11 = vector.load %arg3[%c0_4, %c0_5] : memref<16x64xbf16, #tpu.memory_space<vmem>>, vector<16x64xbf16>
    %cst = arith.constant dense<0.000000e+00> : vector<16x128xf32>
    %12 = tpu.matmul %11, %10, %cst {dimension_numbers = #tpu.dot_dimension_numbers<[1], [0], [0], [1], [0, 0, 1, 1], [], []>} : vector<16x64xbf16>, vector<64x128xbf16>, vector<16x128xf32> -> vector<16x128xf32>
    %13 = arith.truncf %12 : vector<16x128xf32> to vector<16x128xbf16>
    %c0_6 = arith.constant 0 : index
    %c0_7 = arith.constant 0 : index
    %c0_8 = arith.constant 0 : index
    %14 = vector.load %arg4[%c0_6, %c0_7, %c0_8] : memref<1x128x128xbf16, #tpu.memory_space<vmem>>, vector<1x128x128xbf16>
    %15 = vector.shape_cast %14 : vector<1x128x128xbf16> to vector<128x128xbf16>
    %cst_9 = arith.constant dense<0.000000e+00> : vector<16x128xf32>
    %16 = tpu.matmul %13, %15, %cst_9 {dimension_numbers = #tpu.dot_dimension_numbers<[1], [0], [0], [1], [0, 0, 1, 1], [], []>} : vector<16x128xbf16>, vector<128x128xbf16>, vector<16x128xf32> -> vector<16x128xf32>
    %c0_10 = arith.constant 0 : index
    %c0_11 = arith.constant 0 : index
    %c0_12 = arith.constant 0 : index
    %17 = vector.load %arg5[%c0_10, %c0_11, %c0_12] : memref<1x1x128xf32, #tpu.memory_space<vmem>>, vector<1x1x128xf32>
    %18 = vector.shape_cast %17 : vector<1x1x128xf32> to vector<1x128xf32>
    %19 = vector.broadcast %18 : vector<1x128xf32> to vector<16x128xf32>
    %20 = arith.addf %16, %19 : vector<16x128xf32>
    %21 = arith.mulf %20, %20 : vector<16x128xf32>
    %cst_13 = arith.constant dense<0.000000e+00> : vector<16xf32>
    %22 = vector.multi_reduction <add>, %21, %cst_13 [1] : vector<16x128xf32> to vector<16xf32>
    %23 = vector.shape_cast %22 : vector<16xf32> to vector<16x1xf32>
    %cst_14 = arith.constant 1.000000e-24 : f32
    %24 = vector.broadcast %cst_14 : f32 to vector<16x1xf32>
    %25 = arith.maximumf %23, %24 : vector<16x1xf32>
    %26 = math.rsqrt %25 : vector<16x1xf32>
    %27 = vector.broadcast %26 : vector<16x1xf32> to vector<16x128xf32>
    %28 = arith.mulf %20, %27 : vector<16x128xf32>
    %cst_15 = arith.constant 0.000000e+00 : f32
    %29 = vector.broadcast %cst_15 : f32 to vector<16x128xf32>
    %30 = arith.maximumf %28, %29 : vector<16x128xf32>
    %c16_i32 = arith.constant 16 : i32
    %31 = arith.muli %arg1, %c16_i32 : i32
    %32 = tpu.iota {dimensions = array<i32: 0>} : vector<16x1xi32>
    %33 = vector.broadcast %31 : i32 to vector<16x1xi32>
    %34 = arith.addi %33, %32 : vector<16x1xi32>
    %c50_i32 = arith.constant 50 : i32
    %35 = vector.broadcast %c50_i32 : i32 to vector<16x1xi32>
    %36 = arith.cmpi slt, %34, %35 : vector<16x1xi32>
    %cst_16 = arith.constant 0.000000e+00 : f32
    %37 = vector.shape_cast %36 : vector<16x1xi1> to vector<16x1xi1>
    %38 = vector.broadcast %37 : vector<16x1xi1> to vector<16x128xi1>
    %39 = vector.broadcast %cst_16 : f32 to vector<16x128xf32>
    %40 = arith.select %38, %30, %39 : vector<16x128xi1>, vector<16x128xf32>
    %41 = arith.truncf %40 : vector<16x128xf32> to vector<16x128xbf16>
    %42 = arith.index_cast %6 : i32 to index
    %43 = arith.index_cast %arg1 : i32 to index
    %c0_17 = arith.constant 0 : index
    %c0_18 = arith.constant 0 : index
    %44 = vector.load %arg9[%42, %43, %c0_17, %c0_18] : memref<2x4x16x128xbf16, #tpu.memory_space<vmem>>, vector<1x1x16x128xbf16>
    %45 = vector.shape_cast %44 : vector<1x1x16x128xbf16> to vector<16x128xbf16>
    %46 = vector.shape_cast %41 : vector<16x128xbf16> to vector<1x1x16x128xbf16>
    tpu.vector_store %arg9[%42, %43, %c0_17, %c0_18], %46 {strides = array<i32>} : memref<2x4x16x128xbf16, #tpu.memory_space<vmem>>, vector<1x1x16x128xbf16>,
    %cst_19 = arith.constant dense<0.000000e+00> : vector<128xf32>
    %47 = vector.multi_reduction <add>, %40, %cst_19 [0] : vector<16x128xf32> to vector<128xf32>
    %48 = vector.shape_cast %47 : vector<128xf32> to vector<1x128xf32>
    %c0_20 = arith.constant 0 : index
    %c0_21 = arith.constant 0 : index
    %49 = vector.load %arg10[%c0_20, %c0_21] : memref<1x128xf32, #tpu.memory_space<vmem>>, vector<1x128xf32>
    %c0_22 = arith.constant 0 : index
    %c0_23 = arith.constant 0 : index
    %c0_24 = arith.constant 0 : index
    %50 = vector.load %arg6[%c0_22, %c0_23, %c0_24] : memref<1x128x128xf32, #tpu.memory_space<vmem>>, vector<1x128x128xf32>
    %51 = vector.shape_cast %50 : vector<1x128x128xf32> to vector<128x128xf32>
    %cst_25 = arith.constant dense<0.000000e+00> : vector<1x128xf32>
    %52 = tpu.matmul %48, %51, %cst_25 {dimension_numbers = #tpu.dot_dimension_numbers<[1], [0], [0], [1], [0, 0, 1, 1], [], []>} : vector<1x128xf32>, vector<128x128xf32>, vector<1x128xf32> -> vector<1x128xf32>
    %53 = arith.addf %49, %52 : vector<1x128xf32>
    %c0_26 = arith.constant 0 : index
    %c0_27 = arith.constant 0 : index
    %54 = vector.load %arg10[%c0_26, %c0_27] : memref<1x128xf32, #tpu.memory_space<vmem>>, vector<1x128xf32>
    tpu.vector_store %arg10[%c0_26, %c0_27], %53 {strides = array<i32>} : memref<1x128xf32, #tpu.memory_space<vmem>>, vector<1x128xf32>,
    %c2_i32_28 = arith.constant 2 : i32
    %55 = arith.cmpi eq, %arg0, %c2_i32_28 : i32
    %c3_i32 = arith.constant 3 : i32
    %56 = arith.cmpi eq, %arg1, %c3_i32 : i32
    %57 = arith.andi %55, %56 : i1
    %58 = arith.extui %57 : i1 to i32
    %c0_i32_29 = arith.constant 0 : i32
    %59 = arith.cmpi ne, %58, %c0_i32_29 : i32
    scf.if %59 {
      %c0_30 = arith.constant 0 : index
      %c0_31 = arith.constant 0 : index
      %60 = vector.load %arg10[%c0_30, %c0_31] : memref<1x128xf32, #tpu.memory_space<vmem>>, vector<1x128xf32>
      %c0_32 = arith.constant 0 : index
      %c0_33 = arith.constant 0 : index
      %61 = vector.load %arg7[%c0_32, %c0_33] : memref<1x128xf32, #tpu.memory_space<vmem>>, vector<1x128xf32>
      %62 = arith.addf %60, %61 : vector<1x128xf32>
      %c0_34 = arith.constant 0 : index
      %c0_35 = arith.constant 0 : index
      %63 = vector.load %arg8[%c0_34, %c0_35] : memref<1x128xf32, #tpu.memory_space<vmem>>, vector<1x128xf32>
      tpu.vector_store %arg8[%c0_34, %c0_35], %62 {strides = array<i32>} : memref<1x128xf32, #tpu.memory_space<vmem>>, vector<1x128xf32>,
    } else {
    }
    return
  }
  func.func @transform_0(%arg0: i32, %arg1: i32) -> (i32, i32) {
    %c0_i32 = arith.constant 0 : i32
    %c0_i32_0 = arith.constant 0 : i32
    %c0_i32_1 = arith.constant 0 : i32
    return %c0_i32, %c0_i32_0 : i32, i32
  }
  func.func @transform_1(%arg0: i32, %arg1: i32) -> (i32, i32) {
    %c0_i32 = arith.constant 0 : i32
    %c0_i32_0 = arith.constant 0 : i32
    return %arg1, %c0_i32 : i32, i32
  }
  func.func @transform_2(%arg0: i32, %arg1: i32) -> (i32, i32, i32) {
    %c0_i32 = arith.constant 0 : i32
    %c0_i32_0 = arith.constant 0 : i32
    %c0_i32_1 = arith.constant 0 : i32
    return %arg0, %c0_i32, %c0_i32_0 : i32, i32, i32
  }
  func.func @transform_3(%arg0: i32, %arg1: i32) -> (i32, i32, i32) {
    %c0_i32 = arith.constant 0 : i32
    %c0_i32_0 = arith.constant 0 : i32
    %c0_i32_1 = arith.constant 0 : i32
    return %arg0, %c0_i32, %c0_i32_0 : i32, i32, i32
  }
  func.func @transform_4(%arg0: i32, %arg1: i32) -> (i32, i32, i32) {
    %c0_i32 = arith.constant 0 : i32
    %c0_i32_0 = arith.constant 0 : i32
    %c0_i32_1 = arith.constant 0 : i32
    return %arg0, %c0_i32, %c0_i32_0 : i32, i32, i32
  }
  func.func @transform_5(%arg0: i32, %arg1: i32) -> (i32, i32) {
    %c0_i32 = arith.constant 0 : i32
    %c0_i32_0 = arith.constant 0 : i32
    %c0_i32_1 = arith.constant 0 : i32
    return %c0_i32, %c0_i32_0 : i32, i32
  }
  func.func @transform_6(%arg0: i32, %arg1: i32) -> (i32, i32) {
    %c0_i32 = arith.constant 0 : i32
    %c0_i32_0 = arith.constant 0 : i32
    %c0_i32_1 = arith.constant 0 : i32
    return %c0_i32, %c0_i32_0 : i32, i32
  }
}

</mosaic_0001>

<llo_original>
// kernel: tpu_custom_call.1
$region0: #{tpu_custom_call.1}
  #allocation0 [shape = 'u32[]', space=smem, size = 0x4, offset = 0x4, fixed_abs, tag = 'smem constant byte address 0x4 - core index']
  #allocation1 [shape = 'u32[144,128]{1,0:T(1,128)}', space=vmem, size = 0x12000, scoped, tag = 'internal scratch']
  #allocation2 [shape = 'bf16[2,4,16,128]{3,2,1,0:T(16,128)(2,1)}', space=vmem, size = 0x8000, scoped, tag = 'scratch operand']
  #allocation3 [shape = 'f32[1,128]{1,0:T(1,128)}', space=vmem, size = 0x200, scoped, tag = 'scratch operand']
  %s0 = inlined_call_operand.hbm [shape: bf16[64,128], index: 0, kind: input, shape index: {}]
  %s1 = inlined_call_operand.hbm [shape: bf16[64,64], index: 1, kind: input, shape index: {}]
  %s2 = inlined_call_operand.hbm [shape: bf16[3,128,128], index: 2, kind: input, shape index: {}]
  %s3 = inlined_call_operand.vmem [shape: f32[3,1,128], index: 3, kind: input, shape index: {}]
  %s4 = inlined_call_operand.hbm [shape: f32[3,128,128], index: 4, kind: input, shape index: {}]
  %s5 = inlined_call_operand.vmem [shape: f32[1,128], index: 5, kind: input, shape index: {}]
  %s6 = inlined_call_operand.hbm [shape: f32[1,128], index: 6, kind: output, shape index: {}]
  %s7 = sld [smem:[#allocation0]]
  $region81: #{tpu_custom_call.1} parent=0
    _
  %s9 = ssub.s32 1, %s7
  %s10 = scalar_select 0, %s9, %s7
  $region1: #{tpu_custom_call.1} parent=0
    #allocation4 [shape = 'u8[16384]{0}', space=vmem, size = 0x4000, scoped, tag = 'input window, operand 0, single buffered']
    #allocation5 [shape = 's32[2]{0}', space=sflag, size = 0x8, scoped, tag = 'scoped memory for tpu_custom_call.1']
    #allocation6 [shape = 's32[2]{0}', space=sflag, size = 0x8, scoped, tag = 'scoped memory for tpu_custom_call.1']
    #allocation7 [shape = 'u8[8192]{0}', space=vmem, size = 0x2000, scoped, tag = 'input window, operand 1']
    #allocation8 [shape = 's32[2]{0}', space=sflag, size = 0x8, scoped, tag = 'scoped memory for tpu_custom_call.1']
    #allocation9 [shape = 'u8[65536]{0}', space=vmem, size = 0x10000, scoped, tag = 'input window, operand 2']
    #allocation10 [shape = 'u8[131072]{0}', space=vmem, size = 0x20000, scoped, tag = 'input window, operand 4']
    #allocation11 [shape = 's32[2]{0}', space=sflag, size = 0x8, scoped, tag = 'scoped memory for tpu_custom_call.1']
    #allocation12 [shape = 'u8[512]{0}', space=vmem, size = 0x400, scoped, tag = 'output window, operand 0, single buffered']
    %11 = vsyncpa [#allocation5], 0
    %12 = vsyncpa [#allocation8], 0
    %s13 = scalar_lea.sflag [#allocation8], 1
    %14 = vsyncpa %s13, 0
    %15 = vsyncpa [#allocation11], 0
    %s16 = scalar_lea.sflag [#allocation11], 1
    %17 = vsyncpa %s16, 0
    %18 = vsyncpa [#allocation6], 0
    loop: start=0, step=1, limit=14
    $region2: #{tpu_custom_call.1} parent=1 // loop_pre_header
      _
    $region3: #{tpu_custom_call.1} parent=1 // loop_header
      %s20 = sphi 0, %s24
      %p21 = scmp.ge.s32.totalorder %s20, 14
      %s27 = sphi 0, %s39
      %s28 = sphi 0, %s35
      %s29 = sphi 0, %s27
      %s30 = sphi 0, %s28
      %s31 = sphi 0, %s29
      %s32 = sphi 0, %s30
      %s40 = sphi 0, %s40
      %s42 = sphi 0, %s40
      %s43 = sphi 0, %s42
      %s57 = sphi 0, %s43
      %s63 = sphi 0, %s65
      %s66 = sphi 0, %s63
      %s67 = sphi 0, %s66
      %s83 = sphi 0, %s67
      %s89 = sphi 0, %s91
      %s92 = sphi 0, %s89
      %s93 = sphi 0, %s92
      %s109 = sphi 0, %s93
      %s115 = sphi 0, %s117
      %s118 = sphi 0, %s115
      %s119 = sphi 0, %s118
      %s135 = sphi 0, %s119
      %s141 = sphi 0, %s143
      %s144 = sphi 0, %s141
      %s145 = sphi 0, %s144
      %s161 = sphi 0, %s145
      %s165 = sphi 0, %s165
      %s167 = sphi 0, %s165
      %s168 = sphi 0, %s167
      %s182 = sphi 0, %s168
      %s186 = sphi 0, %s186
      %s188 = sphi 0, %s186
      %s189 = sphi 0, %s188
      %s203 = sphi 0, %s189
    $region4: #{tpu_custom_call.1} parent=1 // loop_header_branch
      %23 = sbr.rel (%p21) target = $region8
    $region5: #{tpu_custom_call.1} parent=1 // loop_body
      %s25 = ssub.s32 %s20, 1
      %s26 = ssub.s32 %s20, 2
      %s33 = sadd.s32 1, %s28
      %p34 = scmp.ge.s32.totalorder %s33, 4
      %s35 = scalar_select %p34, 0, %s33
      %s36 = sadd.s32 1, %s27
      %s37 = scalar_select %p34, %s36, %s27
      %p38 = scmp.ge.s32.totalorder %s37, 3
      %s39 = scalar_select %p38, 0, %s37
      %s41 = sadd.s32 %s40, 1
      %p44 = scmp.eq.s32.totalorder %s20, 11
      %p45 = scmp.ne.s32.totalorder %s40, %s42
      %p46 = scmp.eq.s32.totalorder %s20, 0
      %p47 = por %p45, %p46
      %p48 = scmp.ne.s32.totalorder %s40, %s42
      %p49 = scmp.eq.s32.totalorder %s25, 11
      %p50 = por %p48, %p49
      %p51 = scmp.ne.s32.totalorder %s42, %s43
      %p52 = scmp.eq.s32.totalorder %s25, 0
      %p53 = por %p51, %p52
      %p54 = scmp.ne.s32.totalorder %s42, %s43
      %p55 = scmp.eq.s32.totalorder %s26, 11
      %p56 = por %p54, %p55
      %p58 = scmp.ne.s32.totalorder %s43, %s57
      %p59 = scmp.eq.s32.totalorder %s26, 0
      %p60 = por %p58, %p59
      %s61 = ssub.s32 %s28, %s35
      %p62 = scmp.eq.s32.totalorder %s61, 0
      %s64 = sadd.s32 %s63, 1
      %s65 = scalar_select %p62, %s63, %s64
      %p68 = pneg %p62
      %p69 = scmp.eq.s32.totalorder %s20, 11
      %p70 = por %p68, %p69
      %p71 = scmp.ne.s32.totalorder %s63, %s66
      %p72 = scmp.eq.s32.totalorder %s20, 0
      %p73 = por %p71, %p72
      %p74 = scmp.ne.s32.totalorder %s63, %s66
      %p75 = scmp.eq.s32.totalorder %s25, 11
      %p76 = por %p74, %p75
      %p77 = scmp.ne.s32.totalorder %s66, %s67
      %p78 = scmp.eq.s32.totalorder %s25, 0
      %p79 = por %p77, %p78
      %p80 = scmp.ne.s32.totalorder %s66, %s67
      %p81 = scmp.eq.s32.totalorder %s26, 11
      %p82 = por %p80, %p81
      %p84 = scmp.ne.s32.totalorder %s67, %s83
      %p85 = scmp.eq.s32.totalorder %s26, 0
      %p86 = por %p84, %p85
      %s87 = ssub.s32 %s27, %s39
      %p88 = scmp.eq.s32.totalorder %s87, 0
      %s90 = sadd.s32 %s89, 1
      %s91 = scalar_select %p88, %s89, %s90
      %p94 = pneg %p88
      %p95 = scmp.eq.s32.totalorder %s20, 11
      %p96 = por %p94, %p95
      %p97 = scmp.ne.s32.totalorder %s89, %s92
      %p98 = scmp.eq.s32.totalorder %s20, 0
      %p99 = por %p97, %p98
      %p100 = scmp.ne.s32.totalorder %s89, %s92
      %p101 = scmp.eq.s32.totalorder %s25, 11
      %p102 = por %p100, %p101
      %p103 = scmp.ne.s32.totalorder %s92, %s93
      %p104 = scmp.eq.s32.totalorder %s25, 0
      %p105 = por %p103, %p104
      %p106 = scmp.ne.s32.totalorder %s92, %s93
      %p107 = scmp.eq.s32.totalorder %s26, 11
      %p108 = por %p106, %p107
      %p110 = scmp.ne.s32.totalorder %s93, %s109
      %p111 = scmp.eq.s32.totalorder %s26, 0
      %p112 = por %p110, %p111
      %s113 = ssub.s32 %s27, %s39
      %p114 = scmp.eq.s32.totalorder %s113, 0
      %s116 = sadd.s32 %s115, 1
      %s117 = scalar_select %p114, %s115, %s116
      %p120 = pneg %p114
      %p121 = scmp.eq.s32.totalorder %s20, 11
      %p122 = por %p120, %p121
      %p123 = scmp.ne.s32.totalorder %s115, %s118
      %p124 = scmp.eq.s32.totalorder %s20, 0
      %p125 = por %p123, %p124
      %p126 = scmp.ne.s32.totalorder %s115, %s118
      %p127 = scmp.eq.s32.totalorder %s25, 11
      %p128 = por %p126, %p127
      %p129 = scmp.ne.s32.totalorder %s118, %s119
      %p130 = scmp.eq.s32.totalorder %s25, 0
      %p131 = por %p129, %p130
      %p132 = scmp.ne.s32.totalorder %s118, %s119
      %p133 = scmp.eq.s32.totalorder %s26, 11
      %p134 = por %p132, %p133
      %p136 = scmp.ne.s32.totalorder %s119, %s135
      %p137 = scmp.eq.s32.totalorder %s26, 0
      %p138 = por %p136, %p137
      %s139 = ssub.s32 %s27, %s39
      %p140 = scmp.eq.s32.totalorder %s139, 0
      %s142 = sadd.s32 %s141, 1
      %s143 = scalar_select %p140, %s141, %s142
      %p146 = pneg %p140
      %p147 = scmp.eq.s32.totalorder %s20, 11
      %p148 = por %p146, %p147
      %p149 = scmp.ne.s32.totalorder %s141, %s144
      %p150 = scmp.eq.s32.totalorder %s20, 0
      %p151 = por %p149, %p150
      %p152 = scmp.ne.s32.totalorder %s141, %s144
      %p153 = scmp.eq.s32.totalorder %s25, 11
      %p154 = por %p152, %p153
      %p155 = scmp.ne.s32.totalorder %s144, %s145
      %p156 = scmp.eq.s32.totalorder %s25, 0
      %p157 = por %p155, %p156
      %p158 = scmp.ne.s32.totalorder %s144, %s145
      %p159 = scmp.eq.s32.totalorder %s26, 11
      %p160 = por %p158, %p159
      %p162 = scmp.ne.s32.totalorder %s145, %s161
      %p163 = scmp.eq.s32.totalorder %s26, 0
      %p164 = por %p162, %p163
      %s166 = sadd.s32 %s165, 1
      %p169 = scmp.eq.s32.totalorder %s20, 11
      %p170 = scmp.ne.s32.totalorder %s165, %s167
      %p171 = scmp.eq.s32.totalorder %s20, 0
      %p172 = por %p170, %p171
      %p173 = scmp.ne.s32.totalorder %s165, %s167
      %p174 = scmp.eq.s32.totalorder %s25, 11
      %p175 = por %p173, %p174
      %p176 = scmp.ne.s32.totalorder %s167, %s168
      %p177 = scmp.eq.s32.totalorder %s25, 0
      %p178 = por %p176, %p177
      %p179 = scmp.ne.s32.totalorder %s167, %s168
      %p180 = scmp.eq.s32.totalorder %s26, 11
      %p181 = por %p179, %p180
      %p183 = scmp.ne.s32.totalorder %s168, %s182
      %p184 = scmp.eq.s32.totalorder %s26, 0
      %p185 = por %p183, %p184
      %s187 = sadd.s32 %s186, 1
      %p190 = scmp.eq.s32.totalorder %s20, 11
      %p191 = scmp.ne.s32.totalorder %s186, %s188
      %p192 = scmp.eq.s32.totalorder %s20, 0
      %p193 = por %p191, %p192
      %p194 = scmp.ne.s32.totalorder %s186, %s188
      %p195 = scmp.eq.s32.totalorder %s25, 11
      %p196 = por %p194, %p195
      %p197 = scmp.ne.s32.totalorder %s188, %s189
      %p198 = scmp.eq.s32.totalorder %s25, 0
      %p199 = por %p197, %p198
      %p200 = scmp.ne.s32.totalorder %s188, %s189
      %p201 = scmp.eq.s32.totalorder %s26, 11
      %p202 = por %p200, %p201
      %p204 = scmp.ne.s32.totalorder %s189, %s203
      %p205 = scmp.eq.s32.totalorder %s26, 0
      %p206 = por %p204, %p205
      %p207 = scmp.le.s32.totalorder 1, %s20
      %p208 = scmp.lt.s32.totalorder %s20, 13
      %p209 = pnand %p207, %p208
      %p210 = pneg %p209
      // Predicated region
      $region9: #{tpu_custom_call.1} parent=5 // pred_check
        _
      $region10: #{tpu_custom_call.1} parent=5 // pred_check_branch
        %212 = sbr.rel (%p209) target = $region12
      $region11: #{tpu_custom_call.1} parent=5 // pred_region
        %s213 = ssub.s32 %s20, 1
        // Predicated region
        $region13: #{tpu_custom_call.1} parent=11 // pred_check
          %p214 = pneg %p53
        $region14: #{tpu_custom_call.1} parent=11 // pred_check_branch
          %216 = sbr.rel (%p214) target = $region16
        $region15: #{tpu_custom_call.1} parent=11 // pred_region
          %s218 = ssub.s32 512, 512
          %219 = vsyncadd [#allocation5], %s218
          %s220 = sshll.u32 [#allocation4], 4
          %s221 = int_to_ptr.vmem [resolvable:$true] %s220
          %226 = dma.hbm_to_vmem [thread:$0]  %s0, 512, %s221, [#allocation5], 64, 64, 4
        $region16: #{tpu_custom_call.1} parent=11 // pred_fallthru
          _
        // Predicated region
        $region17: #{tpu_custom_call.1} parent=11 // pred_check
          %p227 = pneg %p178
        $region18: #{tpu_custom_call.1} parent=11 // pred_check_branch
          %229 = sbr.rel (%p227) target = $region20
        $region19: #{tpu_custom_call.1} parent=11 // pred_region
          _
        $region20: #{tpu_custom_call.1} parent=11 // pred_fallthru
          _
      $region12: #{tpu_custom_call.1} parent=5 // pred_fallthru
        _
      %p230 = scmp.lt.s32.totalorder %s20, 12
      // Predicated region
      $region21: #{tpu_custom_call.1} parent=5 // pred_check
        %p231 = pneg %p230
      $region22: #{tpu_custom_call.1} parent=5 // pred_check_branch
        %233 = sbr.rel (%p231) target = $region24
      $region23: #{tpu_custom_call.1} parent=5 // pred_region
        // Predicated region
        $region25: #{tpu_custom_call.1} parent=23 // pred_check
          %p234 = pneg %p73
        $region26: #{tpu_custom_call.1} parent=23 // pred_check_branch
          %236 = sbr.rel (%p234) target = $region28
        $region27: #{tpu_custom_call.1} parent=23 // pred_region
          %s237 = sand.u32 %s20, 1
          %s238 = scalar_lea.sflag [#allocation8], %s237
          %s239 = sand.u32 %s63, 1
          %s240 = smul.addr %s239, 8
          %s241 = scalar_lea.vmem [#allocation7], %s240
          %s242 = smul.u32 2, %s28
          %s244 = ssub.s32 128, 128
          %245 = vsyncadd %s238, %s244
          %s246 = smul.addr %s242, 64
          %s247 = scalar_lea.hbm %s1, %s246
          %s248 = sshll.u32 %s241, 4
          %s249 = int_to_ptr.vmem [resolvable:$true] %s248
          %254 = dma.hbm_to_vmem [thread:$0]  %s247, 128, %s249, %s238, 64, 64, 4
        $region28: #{tpu_custom_call.1} parent=23 // pred_fallthru
          _
        // Predicated region
        $region29: #{tpu_custom_call.1} parent=23 // pred_check
          %p255 = pneg %p99
        $region30: #{tpu_custom_call.1} parent=23 // pred_check_branch
          %257 = sbr.rel (%p255) target = $region32
        $region31: #{tpu_custom_call.1} parent=23 // pred_region
          %s258 = sand.u32 %s20, 1
          %s259 = scalar_lea.sflag [#allocation8], %s258
          %s260 = sand.u32 %s89, 1
          %s261 = smul.addr %s260, 64
          %s262 = scalar_lea.vmem [#allocation9], %s261
          %s264 = ssub.s32 1024, 1024
          %265 = vsyncadd %s259, %s264
          %s266 = smul.addr %s27, 16
          %s267 = smul.addr %s266, 64
          %s268 = scalar_lea.hbm %s2, %s267
          %s269 = sshll.u32 %s262, 4
          %s270 = int_to_ptr.vmem [resolvable:$true] %s269
          %275 = dma.hbm_to_vmem [thread:$0]  %s268, 1024, %s270, %s259, 64, 64, 4
        $region32: #{tpu_custom_call.1} parent=23 // pred_fallthru
          _
        // Predicated region
        $region33: #{tpu_custom_call.1} parent=23 // pred_check
          %p276 = pneg %p125
        $region34: #{tpu_custom_call.1} parent=23 // pred_check_branch
          %278 = sbr.rel (%p276) target = $region36
        $region35: #{tpu_custom_call.1} parent=23 // pred_region
          %p279 = scmp.lt.s32.totalorder %s27, 2
          %s280 = scalar_select %p279, %s27, 2
          %s281 = scalar_lea.vmem %s3, %s280
        $region36: #{tpu_custom_call.1} parent=23 // pred_fallthru
          _
        // Predicated region
        $region37: #{tpu_custom_call.1} parent=23 // pred_check
          %p282 = pneg %p151
        $region38: #{tpu_custom_call.1} parent=23 // pred_check_branch
          %284 = sbr.rel (%p282) target = $region40
        $region39: #{tpu_custom_call.1} parent=23 // pred_region
          %s285 = sand.u32 %s141, 1
          %s286 = scalar_lea.sflag [#allocation11], %s285
          %s287 = sand.u32 %s141, 1
          %s288 = smul.addr %s287, 128
          %s289 = scalar_lea.vmem [#allocation10], %s288
          %s291 = ssub.s32 2048, 2048
          %292 = vsyncadd %s286, %s291
          %s293 = smul.addr %s27, 16
          %s294 = smul.addr %s293, 128
          %s295 = scalar_lea.hbm %s4, %s294
          %s296 = sshll.u32 %s289, 4
          %s297 = int_to_ptr.vmem [resolvable:$true] %s296
          %302 = dma.hbm_to_vmem [thread:$0]  %s295, 2048, %s297, %s286, 128, 128, 8
        $region40: #{tpu_custom_call.1} parent=23 // pred_fallthru
          _
      $region24: #{tpu_custom_call.1} parent=5 // pred_fallthru
        _
      %p303 = scmp.le.s32.totalorder 1, %s20
      %p304 = scmp.lt.s32.totalorder %s20, 13
      %p305 = pnand %p303, %p304
      %p306 = pneg %p305
      // Predicated region
      $region41: #{tpu_custom_call.1} parent=5 // pred_check
        _
      $region42: #{tpu_custom_call.1} parent=5 // pred_check_branch
        %308 = sbr.rel (%p305) target = $region44
      $region43: #{tpu_custom_call.1} parent=5 // pred_region
        %s309 = ssub.s32 %s20, 1
        // Predicated region
        $region45: #{tpu_custom_call.1} parent=43 // pred_check
          %p310 = pneg %p53
        $region46: #{tpu_custom_call.1} parent=43 // pred_check_branch
          %312 = sbr.rel (%p310) target = $region48
        $region47: #{tpu_custom_call.1} parent=43 // pred_region
          %313 = dma.done [#allocation5], 512
        $region48: #{tpu_custom_call.1} parent=43 // pred_fallthru
          _
        %s314 = sand.u32 %s25, 1
        %s315 = scalar_lea.sflag [#allocation8], %s314
        %s316 = sand.u32 %s66, 1
        %s317 = smul.addr %s316, 8
        %s318 = scalar_lea.vmem [#allocation7], %s317
        // Predicated region
        $region49: #{tpu_custom_call.1} parent=43 // pred_check
          %p319 = pneg %p79
        $region50: #{tpu_custom_call.1} parent=43 // pred_check_branch
          %321 = sbr.rel (%p319) target = $region52
        $region51: #{tpu_custom_call.1} parent=43 // pred_region
          %322 = dma.done %s315, 128
        $region52: #{tpu_custom_call.1} parent=43 // pred_fallthru
          _
        %s323 = sand.u32 %s25, 1
        %s324 = scalar_lea.sflag [#allocation8], %s323
        %s325 = sand.u32 %s92, 1
        %s326 = smul.addr %s325, 64
        %s327 = scalar_lea.vmem [#allocation9], %s326
        // Predicated region
        $region53: #{tpu_custom_call.1} parent=43 // pred_check
          %p328 = pneg %p105
        $region54: #{tpu_custom_call.1} parent=43 // pred_check_branch
          %330 = sbr.rel (%p328) target = $region56
        $region55: #{tpu_custom_call.1} parent=43 // pred_region
          %331 = dma.done %s324, 1024
        $region56: #{tpu_custom_call.1} parent=43 // pred_fallthru
          _
        %s332 = sand.u32 %s144, 1
        %s333 = scalar_lea.sflag [#allocation11], %s332
        %s334 = sand.u32 %s144, 1
        %s335 = smul.addr %s334, 128
        %s336 = scalar_lea.vmem [#allocation10], %s335
        // Predicated region
        $region57: #{tpu_custom_call.1} parent=43 // pred_check
          %p337 = pneg %p157
        $region58: #{tpu_custom_call.1} parent=43 // pred_check_branch
          %339 = sbr.rel (%p337) target = $region60
        $region59: #{tpu_custom_call.1} parent=43 // pred_region
          %340 = dma.done %s333, 2048
        $region60: #{tpu_custom_call.1} parent=43 // pred_fallthru
          _
        %p341 = pneg %p53
        %p342 = pneg %p50
        %s343 = sand.u32 %s25, 1
        %s344 = scalar_lea.sflag [#allocation8], %s343
        %s345 = sand.u32 %s66, 1
        %s346 = smul.addr %s345, 8
        %s347 = scalar_lea.vmem [#allocation7], %s346
        %p348 = pneg %p79
        %p349 = pneg %p76
        %s350 = sand.u32 %s25, 1
        %s351 = scalar_lea.sflag [#allocation8], %s350
        %s352 = sand.u32 %s92, 1
        %s353 = smul.addr %s352, 64
        %s354 = scalar_lea.vmem [#allocation9], %s353
        %p355 = pneg %p105
        %p356 = pneg %p102
        %p357 = scmp.lt.s32.totalorder %s29, 2
        %s358 = scalar_select %p357, %s29, 2
        %s359 = scalar_lea.vmem %s3, %s358
        %p360 = pneg %p131
        %p361 = pneg %p128
        %s362 = sand.u32 %s144, 1
        %s363 = scalar_lea.sflag [#allocation11], %s362
        %s364 = sand.u32 %s144, 1
        %s365 = smul.addr %s364, 128
        %s366 = scalar_lea.vmem [#allocation10], %s365
        %p367 = pneg %p157
        %p368 = pneg %p154
        %p369 = pneg %p178
        %p370 = pneg %p175
        %p371 = pneg %p199
        %p372 = pneg %p196
        %s373 = smul.u32 2, %s30
        %p374 = scmp.lt.s32.totalorder %s29, 2
        %s375 = scalar_select %p374, %s29, 2
        %s376 = scalar_lea.vmem %s3, %s375
        %p378 = scmp.eq.s32.totalorder %s29, 0
        %p379 = scmp.eq.s32.totalorder %s30, 0
        %p380 = pnand %p378, %p379
        %p381 = pneg %p380
        // Predicated region
        $region61: #{tpu_custom_call.1} parent=43 // pred_check
          _
        $region62: #{tpu_custom_call.1} parent=43 // pred_check_branch
          %383 = sbr.rel (%p380) target = $region64
        $region63: #{tpu_custom_call.1} parent=43 // pred_region
          %v384 = vld [vmem:[#allocation4] sm:$0xf]
          %v385 = vld [vmem:[#allocation4 + $0x4] sm:$0xf]
          %v386 = vld [vmem:[#allocation4 + $0x8] sm:$0xf]
          %v387 = vld [vmem:[#allocation4 + $0xc] sm:$0xf]
          %v388 = vld [vmem:[#allocation4 + $0x10] sm:$0xf]
          %v389 = vld [vmem:[#allocation4 + $0x14] sm:$0xf]
          %v390 = vld [vmem:[#allocation4 + $0x18] sm:$0xf]
          %v391 = vld [vmem:[#allocation4 + $0x1c] sm:$0xf]
          %v400 = vunpack.c.l.b16 %v384
          %v401 = vunpack.c.l.b16 %v385
          %v402 = vunpack.c.l.b16 %v386
          %v403 = vunpack.c.l.b16 %v387
          %v404 = vunpack.c.l.b16 %v388
          %v405 = vunpack.c.l.b16 %v389
          %v406 = vunpack.c.l.b16 %v390
          %v407 = vunpack.c.l.b16 %v391
          %v408 = vpack.c.b16 %v401, %v400
          %v409 = vpack.c.b16 %v403, %v402
          %v410 = vpack.c.b16 %v405, %v404
          %v411 = vpack.c.b16 %v407, %v406
          %416 = vst [vmem:[#allocation2] sm:$0xff] %v408
          %417 = vst [vmem:[#allocation2 + $0x8] sm:$0xff] %v409
          %418 = vst [vmem:[#allocation2 + $0x10] sm:$0xff] %v410
          %419 = vst [vmem:[#allocation2 + $0x18] sm:$0xff] %v411
          %420 = vst [vmem:[#allocation3] sm:$0x1] 0.0
        $region64: #{tpu_custom_call.1} parent=43 // pred_fallthru
          _
        %p421 = scmp.lt.s32.totalorder %s29, 0
        %s422 = ssub.s32 0, %s29
        %s423 = scalar_select %p421, %s422, %s29
        %s424 = sand.u32 %s423, 1
        %s425 = ssub.s32 0, %s424
        %s426 = scalar_select %p421, %s425, %s424
        %s427 = ssub.s32 1, %s426
        %s428 = smul.u32 %s426, 4
        %s429 = smul.addr %s428, 8
        %s430 = scalar_lea.vmem [#allocation2], %s429
        %v431 = vld [vmem:[%s430] sm:$0xff]
        %v432 = vld [vmem:[%s430 + $0x8] sm:$0xff]
        %v433 = vld [vmem:[%s430 + $0x10] sm:$0xff]
        %v434 = vld [vmem:[%s430 + $0x18] sm:$0xff]
        %v435 = vld [vmem:[%s318] sm:$0xf]
        %v436 = vld [vmem:[%s318 + $0x4] sm:$0xf]
        %v439 = vunpack.c.l.b16 %v435
        %v440 = vunpack.c.l.b16 %v436
        %v441 = vpack.c.b16 %v440, %v439
        %vm442 = vcmask 523264
        %v444 = vsel %vm442, %v441, 0
        %446 = vmatprep.subr.bf16.mxu0 0
        %447 = vmatpush1.bf16.msra.mxu0 %v431
        %448 = vmatprep.subr.bf16.mxu0 0
        %449 = vmatpush1.bf16.msra.mxu0 %v432
        %450 = vmatprep.subr.bf16.mxu0 0
        %451 = vmatpush1.bf16.msra.mxu0 %v433
        %452 = vmatprep.subr.bf16.mxu0 0
        %453 = vmatpush1.bf16.msra.mxu0 %v434
        %454 = vmatprep.subr.bf16.mxu0 0
        %455 = vmatpush1.bf16.msra.mxu0 0
        %456 = vmatprep.subr.bf16.mxu0 0
        %457 = vmatpush1.bf16.msra.mxu0 0
        %458 = vmatprep.subr.bf16.mxu0 0
        %459 = vmatpush1.bf16.msra.mxu0 0
        %460 = vmatprep.subr.bf16.mxu0 0
        %461 = vmatpush1.bf16.msra.mxu0 0
        %462 = vmatprep.subr.bf16.mxu0 0
        %463 = vmatpush1.bf16.msra.mxu0 0
        %464 = vmatprep.subr.bf16.mxu0 0
        %465 = vmatpush1.bf16.msra.mxu0 0
        %466 = vmatprep.subr.bf16.mxu0 0
        %467 = vmatpush1.bf16.msra.mxu0 0
        %468 = vmatprep.subr.bf16.mxu0 0
        %469 = vmatpush1.bf16.msra.mxu0 0
        %470 = vmatprep.subr.bf16.mxu0 0
        %471 = vmatpush1.bf16.msra.mxu0 0
        %472 = vmatprep.subr.bf16.mxu0 0
        %473 = vmatpush1.bf16.msra.mxu0 0
        %474 = vmatprep.subr.bf16.mxu0 0
        %475 = vmatpush1.bf16.msra.mxu0 0
        %476 = vmatprep.subr.bf16.mxu0 0
        %477 = vmatpush1.bf16.msra.mxu0 0
        %478 = vmatprep.mubr.bf16.mxu0 0
        %479 = vmatmul.mubr.bf16.gmra.mrb[0].mxu0 %v444
        %v480 = vpop.f32.mrb[0].mxu0
        %v481 = vadd.f32 0.0, %v480
        %v482 = vpop.f32.mrb[0].mxu0
        %v483 = vpop.f32.mrb[0].mxu0
        %v484 = vadd.f32 0.0, %v483
        %v485 = vpop.f32.mrb[0].mxu0
        %486 = vdwg.mxu0
        %v487 = vpack.c.bf16 %v484, %v481
        %v488 = vld [vmem:[%s327] sm:$0xf]
        %v489 = vld [vmem:[%s327 + $0x4] sm:$0xf]
        %v490 = vld [vmem:[%s327 + $0x8] sm:$0xf]
        %v491 = vld [vmem:[%s327 + $0xc] sm:$0xf]
        %v492 = vld [vmem:[%s327 + $0x10] sm:$0xf]
        %v493 = vld [vmem:[%s327 + $0x14] sm:$0xf]
        %v494 = vld [vmem:[%s327 + $0x18] sm:$0xf]
        %v495 = vld [vmem:[%s327 + $0x1c] sm:$0xf]
        %v496 = vld [vmem:[%s327 + $0x20] sm:$0xf]
        %v497 = vld [vmem:[%s327 + $0x24] sm:$0xf]
        %v498 = vld [vmem:[%s327 + $0x28] sm:$0xf]
        %v499 = vld [vmem:[%s327 + $0x2c] sm:$0xf]
        %v500 = vld [vmem:[%s327 + $0x30] sm:$0xf]
        %v501 = vld [vmem:[%s327 + $0x34] sm:$0xf]
        %v502 = vld [vmem:[%s327 + $0x38] sm:$0xf]
        %v503 = vld [vmem:[%s327 + $0x3c] sm:$0xf]
        %v504 = vld [vmem:[%s376] sm:$0x1]
        %v506 = vlaneseq
        %v507 = vshrl.u32 %v506, 7
        %v508 = vsub.s32 0, %v507
        %v509 = vrot.slane %v504, %v508
        %v527 = vunpack.c.l.b16 %v488
        %v528 = vunpack.c.l.b16 %v489
        %v529 = vunpack.c.l.b16 %v490
        %v530 = vunpack.c.l.b16 %v491
        %v531 = vunpack.c.l.b16 %v492
        %v532 = vunpack.c.l.b16 %v493
        %v533 = vunpack.c.l.b16 %v494
        %v534 = vunpack.c.l.b16 %v495
        %v535 = vunpack.c.l.b16 %v496
        %v536 = vunpack.c.l.b16 %v497
        %v537 = vunpack.c.l.b16 %v498
        %v538 = vunpack.c.l.b16 %v499
        %v539 = vunpack.c.l.b16 %v500
        %v540 = vunpack.c.l.b16 %v501
        %v541 = vunpack.c.l.b16 %v502
        %v542 = vunpack.c.l.b16 %v503
        %v543 = vpack.c.b16 %v528, %v527
        %v544 = vpack.c.b16 %v530, %v529
        %v545 = vpack.c.b16 %v532, %v531
        %v546 = vpack.c.b16 %v534, %v533
        %v547 = vpack.c.b16 %v536, %v535
        %v548 = vpack.c.b16 %v538, %v537
        %v549 = vpack.c.b16 %v540, %v539
        %v550 = vpack.c.b16 %v542, %v541
        %559 = vmatprep.subr.bf16.mxu0 0
        %560 = vmatpush1.bf16.msra.mxu0 %v543
        %561 = vmatprep.subr.bf16.mxu0 0
        %562 = vmatpush1.bf16.msra.mxu0 %v544
        %563 = vmatprep.subr.bf16.mxu0 0
        %564 = vmatpush1.bf16.msra.mxu0 %v545
        %565 = vmatprep.subr.bf16.mxu0 0
        %566 = vmatpush1.bf16.msra.mxu0 %v546
        %567 = vmatprep.subr.bf16.mxu0 0
        %568 = vmatpush1.bf16.msra.mxu0 %v547
        %569 = vmatprep.subr.bf16.mxu0 0
        %570 = vmatpush1.bf16.msra.mxu0 %v548
        %571 = vmatprep.subr.bf16.mxu0 0
        %572 = vmatpush1.bf16.msra.mxu0 %v549
        %573 = vmatprep.subr.bf16.mxu0 0
        %574 = vmatpush1.bf16.msra.mxu0 %v550
        %575 = vmatprep.subr.bf16.mxu0 0
        %576 = vmatpush1.bf16.msra.mxu0 0
        %577 = vmatprep.subr.bf16.mxu0 0
        %578 = vmatpush1.bf16.msra.mxu0 0
        %579 = vmatprep.subr.bf16.mxu0 0
        %580 = vmatpush1.bf16.msra.mxu0 0
        %581 = vmatprep.subr.bf16.mxu0 0
        %582 = vmatpush1.bf16.msra.mxu0 0
        %583 = vmatprep.subr.bf16.mxu0 0
        %584 = vmatpush1.bf16.msra.mxu0 0
        %585 = vmatprep.subr.bf16.mxu0 0
        %586 = vmatpush1.bf16.msra.mxu0 0
        %587 = vmatprep.subr.bf16.mxu0 0
        %588 = vmatpush1.bf16.msra.mxu0 0
        %589 = vmatprep.subr.bf16.mxu0 0
        %590 = vmatpush1.bf16.msra.mxu0 0
        %591 = vmatprep.mubr.bf16.mxu0 0
        %592 = vmatmul.mubr.bf16.gmra.mrb[0].mxu0 %v487
        %v593 = vpop.f32.mrb[0].mxu0
        %v594 = vadd.f32 %v509, %v593
        %v595 = vpop.f32.mrb[0].mxu0
        %v596 = vpop.f32.mrb[0].mxu0
        %v597 = vadd.f32 %v509, %v596
        %v598 = vpop.f32.mrb[0].mxu0
        %599 = vdwg.mxu0
        %v600 = vmul.f32 %v594, %v594
        %v601 = vmul.f32 %v597, %v597
        %602 = vadd.xlane.f32.xlu0 %v600
        %v603 = vpop.xlane.xlu0 %602
        %604 = vadd.xlane.f32.xlu0 %v601
        %v605 = vpop.xlane.xlu0 %604
        %v606 = vmax.f32 %v603, 1e-24
        %v607 = vmax.f32 %v605, 1e-24
        %v608 = vrsqrt.pop %v606
        %v609 = vrsqrt.pop %v607
        %v610 = vmul.f32 %v594, %v608
        %v611 = vmul.f32 %v597, %v609
        %v612 = vmax.f32 %v610, 0.0
        %v613 = vmax.f32 %v611, 0.0
        %s614 = smul.u32 %s30, 16
        %v615 = vlaneseq
        %v616 = vshrl.u32 %v615, 7
        %v617 = vadd.s32 %v616, 8
        %v618 = vstv %s614
        %v619 = vadd.s32 %v618, %v616
        %v620 = vadd.s32 %v618, %v617
        %vm621 = vcmp.lt.s32.totalorder %v619, 50
        %vm622 = vcmp.lt.s32.totalorder %v620, 50
        %v623 = vsel %vm621, 1, 0
        %v624 = vsel %vm622, 1, 0
        %vm625 = vcmp.eq.s32.totalorder %v623, 1
        %vm626 = vcmp.eq.s32.totalorder %v624, 1
        %v627 = vsel %vm625, %v612, 0.0
        %v628 = vsel %vm626, %v613, 0.0
        %v629 = vpack.c.bf16 %v628, %v627
        %s630 = smul.u32 %s427, 4
        %s631 = sadd.s32 %s30, %s630
        %s632 = smul.addr %s631, 8
        %s633 = scalar_lea.vmem [#allocation2], %s632
        %634 = vst [vmem:[%s633] sm:$0xff] %v629
        %v635 = vadd.f32 %v627, %v628
        %v636 = vrot.slane %v635, 4
        %v637 = vadd.f32 %v635, %v636
        %v638 = vrot.slane %v637, 2
        %v639 = vadd.f32 %v637, %v638
        %v640 = vrot.slane %v639, 1
        %v641 = vadd.f32 %v639, %v640
        %v642 = vld [vmem:[#allocation3] sm:$0x1]
        %v643 = vld [vmem:[%s336] sm:$0xff]
        %v644 = vld [vmem:[%s336 + $0x8] sm:$0xff]
        %v645 = vld [vmem:[%s336 + $0x10] sm:$0xff]
        %v646 = vld [vmem:[%s336 + $0x18] sm:$0xff]
        %v647 = vld [vmem:[%s336 + $0x20] sm:$0xff]
        %v648 = vld [vmem:[%s336 + $0x28] sm:$0xff]
        %v649 = vld [vmem:[%s336 + $0x30] sm:$0xff]
        %v650 = vld [vmem:[%s336 + $0x38] sm:$0xff]
        %v651 = vld [vmem:[%s336 + $0x40] sm:$0xff]
        %v652 = vld [vmem:[%s336 + $0x48] sm:$0xff]
        %v653 = vld [vmem:[%s336 + $0x50] sm:$0xff]
        %v654 = vld [vmem:[%s336 + $0x58] sm:$0xff]
        %v655 = vld [vmem:[%s336 + $0x60] sm:$0xff]
        %v656 = vld [vmem:[%s336 + $0x68] sm:$0xff]
        %v657 = vld [vmem:[%s336 + $0x70] sm:$0xff]
        %v658 = vld [vmem:[%s336 + $0x78] sm:$0xff]
        %659 = vmatprep.subr.mxu0 0.0
        %660 = vmatpush1.msra.mxu0 %v643
        %661 = vmatprep.subr.mxu0 0.0
        %662 = vmatpush1.msra.mxu0 %v644
        %663 = vmatprep.subr.mxu0 0.0
        %664 = vmatpush1.msra.mxu0 %v645
        %665 = vmatprep.subr.mxu0 0.0
        %666 = vmatpush1.msra.mxu0 %v646
        %667 = vmatprep.subr.mxu0 0.0
        %668 = vmatpush1.msra.mxu0 %v647
        %669 = vmatprep.subr.mxu0 0.0
        %670 = vmatpush1.msra.mxu0 %v648
        %671 = vmatprep.subr.mxu0 0.0
        %672 = vmatpush1.msra.mxu0 %v649
        %673 = vmatprep.subr.mxu0 0.0
        %674 = vmatpush1.msra.mxu0 %v650
        %675 = vmatprep.subr.mxu0 0.0
        %676 = vmatpush1.msra.mxu0 %v651
        %677 = vmatprep.subr.mxu0 0.0
        %678 = vmatpush1.msra.mxu0 %v652
        %679 = vmatprep.subr.mxu0 0.0
        %680 = vmatpush1.msra.mxu0 %v653
        %681 = vmatprep.subr.mxu0 0.0
        %682 = vmatpush1.msra.mxu0 %v654
        %683 = vmatprep.subr.mxu0 0.0
        %684 = vmatpush1.msra.mxu0 %v655
        %685 = vmatprep.subr.mxu0 0.0
        %686 = vmatpush1.msra.mxu0 %v656
        %687 = vmatprep.subr.mxu0 0.0
        %688 = vmatpush1.msra.mxu0 %v657
        %689 = vmatprep.subr.mxu0 0.0
        %690 = vmatpush1.msra.mxu0 %v658
        %691 = vmatprep.subr.mxu0 0.0
        %692 = vmatpush1.msra.mxu0 0.0
        %693 = vmatprep.subr.mxu0 0.0
        %694 = vmatpush1.msra.mxu0 0.0
        %695 = vmatprep.subr.mxu0 0.0
        %696 = vmatpush1.msra.mxu0 0.0
        %697 = vmatprep.subr.mxu0 0.0
        %698 = vmatpush1.msra.mxu0 0.0
        %699 = vmatprep.subr.mxu0 0.0
        %700 = vmatpush1.msra.mxu0 0.0
        %701 = vmatprep.subr.mxu0 0.0
        %702 = vmatpush1.msra.mxu0 0.0
        %703 = vmatprep.subr.mxu0 0.0
        %704 = vmatpush1.msra.mxu0 0.0
        %705 = vmatprep.subr.mxu0 0.0
        %706 = vmatpush1.msra.mxu0 0.0
        %707 = vmatprep.subr.mxu0 0.0
        %708 = vmatpush1.msra.mxu0 0.0
        %709 = vmatprep.subr.mxu0 0.0
        %710 = vmatpush1.msra.mxu0 0.0
        %711 = vmatprep.subr.mxu0 0.0
        %712 = vmatpush1.msra.mxu0 0.0
        %713 = vmatprep.subr.mxu0 0.0
        %714 = vmatpush1.msra.mxu0 0.0
        %715 = vmatprep.subr.mxu0 0.0
        %716 = vmatpush1.msra.mxu0 0.0
        %717 = vmatprep.subr.mxu0 0.0
        %718 = vmatpush1.msra.mxu0 0.0
        %719 = vmatprep.subr.mxu0 0.0
        %720 = vmatpush1.msra.mxu0 0.0
        %721 = vmatprep.subr.mxu0 0.0
        %722 = vmatpush1.msra.mxu0 0.0
        %723 = vmatprep.mubr.f32.mxu0 0.0
        %724 = vmatmul.mubr.f32.gmra.mrb[0].mxu0 %v641
        %v725 = vpop.f32.mrb[0].mxu0
        %v726 = vadd.f32 0.0, %v725
        %v727 = vpop.f32.mrb[0].mxu0
        %728 = vdwg.mxu0
        %v729 = vadd.f32 %v642, %v726
        %730 = vst [vmem:[#allocation3] sm:$0x1] %v729
        %p731 = scmp.eq.s32.totalorder %s29, 2
        %p732 = scmp.eq.s32.totalorder %s30, 3
        %p733 = pnand %p731, %p732
        %p734 = pneg %p733
        // Predicated region
        $region65: #{tpu_custom_call.1} parent=43 // pred_check
          _
        $region66: #{tpu_custom_call.1} parent=43 // pred_check_branch
          %736 = sbr.rel (%p733) target = $region68
        $region67: #{tpu_custom_call.1} parent=43 // pred_region
          %v737 = vld [vmem:[#allocation3] sm:$0x1]
          %v738 = vld [vmem:[%s5] sm:$0x1]
          %v739 = vadd.f32 %v737, %v738
          %740 = vst [vmem:[#allocation12] sm:$0x1] %v739
        $region68: #{tpu_custom_call.1} parent=43 // pred_fallthru
          _
        // Predicated region
        $region69: #{tpu_custom_call.1} parent=43 // pred_check
          %p741 = pneg %p196
        $region70: #{tpu_custom_call.1} parent=43 // pred_check_branch
          %743 = sbr.rel (%p741) target = $region72
        $region71: #{tpu_custom_call.1} parent=43 // pred_region
          %s745 = ssub.s32 16, 16
          %746 = vsyncadd [#allocation6], %s745
          %s748 = sshll.u32 [#allocation12], 4
          %s749 = int_to_ptr.vmem [resolvable:$true] %s748
          %751 = dma.vmem_to_hbm [thread:$0]  %s749, 16, %s6, [#allocation6]
        $region72: #{tpu_custom_call.1} parent=43 // pred_fallthru
          _
        // Predicated region
        $region73: #{tpu_custom_call.1} parent=43 // pred_check
          %p752 = pneg %p196
        $region74: #{tpu_custom_call.1} parent=43 // pred_check_branch
          %754 = sbr.rel (%p752) target = $region76
        $region75: #{tpu_custom_call.1} parent=43 // pred_region
          %755 = dma.done [#allocation6], 16
        $region76: #{tpu_custom_call.1} parent=43 // pred_fallthru
          _
      $region44: #{tpu_custom_call.1} parent=5 // pred_fallthru
        _
      %p756 = scmp.le.s32.totalorder 2, %s20
      // Predicated region
      $region77: #{tpu_custom_call.1} parent=5 // pred_check
        %p757 = pneg %p756
      $region78: #{tpu_custom_call.1} parent=5 // pred_check_branch
        %759 = sbr.rel (%p757) target = $region80
      $region79: #{tpu_custom_call.1} parent=5 // pred_region
        %s760 = ssub.s32 %s20, 2
      $region80: #{tpu_custom_call.1} parent=5 // pred_fallthru
        _
    $region6: #{tpu_custom_call.1} parent=1 // loop_footer
      %s24 = sadd.s32 1, %s20
    $region7: #{tpu_custom_call.1} parent=1 // loop_footer_branch
      %19 = sbr.rel target = $region3
    $region8: #{tpu_custom_call.1} parent=1 // loop_exit
      _
    %761 = vsyncpa [#allocation5], 1
    %s762 = scalar_lea.sflag [#allocation5], 1
    %763 = vsyncpa %s762, 1
    %764 = vsyncpa [#allocation8], 1
    %s765 = scalar_lea.sflag [#allocation8], 1
    %766 = vsyncpa %s765, 1
    %767 = vsyncpa [#allocation11], 1
    %s768 = scalar_lea.sflag [#allocation11], 1
    %769 = vsyncpa %s768, 1
    %770 = vsyncpa [#allocation6], 1
    %s771 = scalar_lea.sflag [#allocation6], 1
    %772 = vsyncpa %s771, 1

</llo_original>
